<compile_context>
chip_gen: v6e
topology: v6e:2x2x1
jax: 0.10.0
libtpu: 0.0.40
codegen_flags: <defaults>
</compile_context>

<pallas_src>
import math
import jax
import jax.numpy as jnp
from jax.experimental import pallas as pl
from jax.experimental.pallas import tpu as pltpu  # noqa: F401  (TPU backend)

_BN_EPS = 1e-5


# ---------------- fused Pallas kernel (all layers in one body) ------------------------------


def _make_fused_kernel(kinds, has_bias, batch):
    """Build a kernel that runs the whole layer chain in VMEM.

    Ref layout: (x_ref, [w_ref, (b_ref if has_bias)] per layer, o_ref).
    kinds[i] in {"bn_relu", "linear", "tanh"}.
    """
    inv_b = 1.0 / float(batch)

    def kernel(*refs):
        x_ref = refs[0]
        o_ref = refs[-1]
        h = x_ref[...]
        idx = 1
        for kind, hb in zip(kinds, has_bias):
            w = refs[idx][...]
            idx += 1
            # MXU matmul, f32 accumulation. (bf16 operands only pay off at MXU scale.)
            y = jnp.dot(h, w, preferred_element_type=jnp.float32)
            if hb:
                y = y + refs[idx][...]
                idx += 1
            if kind == "bn_relu":
                # One-pass BatchNorm1d (training mode) stats: sum and sum-of-squares.
                s = jnp.sum(y, axis=0, keepdims=True)
                ss = jnp.sum(y * y, axis=0, keepdims=True)
                mean = s * inv_b
                var = jnp.maximum(ss * inv_b - mean * mean, 0.0)  # guard f32 cancellation
                y = (y - mean) * jax.lax.rsqrt(var + _BN_EPS)     # gamma=1, beta=0
                y = jnp.maximum(y, 0.0)                           # ReLU
            elif kind == "tanh":
                y = jnp.tanh(y)
            h = y
        o_ref[...] = h

    return kernel


def _fused_forward(x, layers):
    """Single pallas_call over the full layer chain. x: [B, in_dim] f32."""
    B, in_dim = x.shape
    kinds = [k for (_, _, k) in layers]
    # Bias is algebraically dead for Linear layers followed by BatchNorm (gamma=1, beta=0).
    has_bias = [k != "bn_relu" for k in kinds]
    out_dim = layers[-1][0].shape[1]

    inputs = [x]
    in_specs = [pl.BlockSpec((B, in_dim), lambda: (0, 0))]
    for (w_t, b, _), hb in zip(layers, has_bias):
        d_in, d_out = w_t.shape
        inputs.append(w_t)
        in_specs.append(pl.BlockSpec((d_in, d_out), lambda: (0, 0)))
        if hb:
            inputs.append(b)
            in_specs.append(pl.BlockSpec((1, d_out), lambda: (0, 0)))

    kernel = _make_fused_kernel(kinds, has_bias, B)
    return pl.pallas_call(
        kernel,
        out_shape=jax.ShapeDtypeStruct((B, out_dim), jnp.float32),
        in_specs=in_specs,
        out_specs=pl.BlockSpec((B, out_dim), lambda: (0, 0)),
    )(*inputs)


# ---------------- parameter construction (deterministic, PyTorch-style init) ----------------


def _init_linear(key, d_in, d_out):
    # nn.Linear default: U(-1/sqrt(fan_in), 1/sqrt(fan_in)) for both W and b.
    kw, kb = jax.random.split(key)
    bound = 1.0 / math.sqrt(d_in)
    w = jax.random.uniform(kw, (d_out, d_in), jnp.float32, -bound, bound)  # [out, in] like torch
    b = jax.random.uniform(kb, (d_out,), jnp.float32, -bound, bound)
    return w, b


def build_autoencoder_params(key, in_dim, h_dim_list, bottleneck_dim):
    """Returns (encoder_layers, decoder_layers); each layer = (W_t[in,out], b[1,out], kind)."""
    enc_dims = [in_dim] + list(h_dim_list) + [bottleneck_dim]
    dec_dims = [bottleneck_dim] + list(reversed(h_dim_list)) + [in_dim]

    def make(dims, final_kind, key):
        layers = []
        for i in range(len(dims) - 1):
            key, sub = jax.random.split(key)
            w, b = _init_linear(sub, dims[i], dims[i + 1])
            kind = "bn_relu" if i < len(dims) - 2 else final_kind
            layers.append((jnp.transpose(w), b.reshape(1, -1), kind))
        return layers, key

    enc, key = make(enc_dims, "linear", key)
    dec, key = make(dec_dims, "tanh", key)
    return enc, dec


def autoencoder_forward(x, enc_layers, dec_layers):
    """Forward pass matching AutoEncoder.forward (tanh applied after decoder)."""
    is_flat = x.ndim == 1
    if is_flat:
        # TODO(synk): PyTorch BatchNorm1d in training mode raises for batch size 1;
        # this path normalizes a batch of 1 (degenerate) instead of erroring.
        x = x[None, :]
    h = _fused_forward(x, enc_layers + dec_layers)
    if is_flat:
        h = jnp.squeeze(h, axis=0)
    return h


# ---------------- pure-JAX reference for validation (full PyTorch semantics, with bias) -----


def _reference_forward(x, enc_layers, dec_layers):
    h = x
    for (w_t, b, kind) in enc_layers + dec_layers:
        y = h @ w_t + b
        if kind == "bn_relu":
            mean = jnp.mean(y, axis=0, keepdims=True)
            var = jnp.mean((y - mean) ** 2, axis=0, keepdims=True)
            y = (y - mean) / jnp.sqrt(var + _BN_EPS)
            y = jnp.maximum(y, 0.0)
        elif kind == "tanh":
            y = jnp.tanh(y)
        h = y
    return h


if __name__ == "__main__":
    key = jax.random.PRNGKey(0)
    B, in_dim, h_dim_list, bottleneck_dim = 8, 32, [64, 32], 16

    k_params, k_x = jax.random.split(key)
    enc_layers, dec_layers = build_autoencoder_params(k_params, in_dim, h_dim_list, bottleneck_dim)

    x = jax.random.normal(k_x, (B, in_dim), jnp.float32)

    out = autoencoder_forward(x, enc_layers, dec_layers)
    out = jax.block_until_ready(out)

    ref = _reference_forward(x, enc_layers, dec_layers)
    assert out.shape == (B, in_dim)
    # Kernel drops the (mean-cancelled) bias and uses one-pass variance; allow tiny fp drift.
    assert jnp.allclose(out, ref, atol=1e-4, rtol=1e-4)

    print("KERNEL_OK")
</pallas_src>

<mosaic_0001>
module attributes {stable_mosaic.version = 11 : i64} {
  func.func @kernel(%arg0: memref<8x32xf32, #tpu.memory_space<vmem>>, %arg1: memref<32x64xf32, #tpu.memory_space<vmem>>, %arg2: memref<64x32xf32, #tpu.memory_space<vmem>>, %arg3: memref<32x16xf32, #tpu.memory_space<vmem>>, %arg4: memref<1x16xf32, #tpu.memory_space<vmem>>, %arg5: memref<16x32xf32, #tpu.memory_space<vmem>>, %arg6: memref<32x64xf32, #tpu.memory_space<vmem>>, %arg7: memref<64x32xf32, #tpu.memory_space<vmem>>, %arg8: memref<1x32xf32, #tpu.memory_space<vmem>>, %arg9: memref<8x32xf32, #tpu.memory_space<vmem>>) attributes {dimension_semantics = [], scalar_prefetch = 0 : i64, scratch_operands = 0 : i64, tpu.core_type = #tpu.core_type<tc>} {
    %c0 = arith.constant 0 : index
    %c0_0 = arith.constant 0 : index
    %0 = vector.load %arg0[%c0, %c0_0] : memref<8x32xf32, #tpu.memory_space<vmem>>, vector<8x32xf32>
    %c0_1 = arith.constant 0 : index
    %c0_2 = arith.constant 0 : index
    %1 = vector.load %arg1[%c0_1, %c0_2] : memref<32x64xf32, #tpu.memory_space<vmem>>, vector<32x64xf32>
    %cst = arith.constant dense<0.000000e+00> : vector<8x64xf32>
    %2 = tpu.matmul %0, %1, %cst {dimension_numbers = #tpu.dot_dimension_numbers<[1], [0], [0], [1], [0, 0, 1, 1], [], []>} : vector<8x32xf32>, vector<32x64xf32>, vector<8x64xf32> -> vector<8x64xf32>
    %cst_3 = arith.constant dense<0.000000e+00> : vector<64xf32>
    %3 = vector.multi_reduction <add>, %2, %cst_3 [0] : vector<8x64xf32> to vector<64xf32>
    %4 = vector.shape_cast %3 : vector<64xf32> to vector<1x64xf32>
    %5 = arith.mulf %2, %2 : vector<8x64xf32>
    %cst_4 = arith.constant dense<0.000000e+00> : vector<64xf32>
    %6 = vector.multi_reduction <add>, %5, %cst_4 [0] : vector<8x64xf32> to vector<64xf32>
    %7 = vector.shape_cast %6 : vector<64xf32> to vector<1x64xf32>
    %cst_5 = arith.constant 1.250000e-01 : f32
    %8 = vector.broadcast %cst_5 : f32 to vector<1x64xf32>
    %9 = arith.mulf %4, %8 : vector<1x64xf32>
    %cst_6 = arith.constant 1.250000e-01 : f32
    %10 = vector.broadcast %cst_6 : f32 to vector<1x64xf32>
    %11 = arith.mulf %7, %10 : vector<1x64xf32>
    %12 = arith.mulf %9, %9 : vector<1x64xf32>
    %13 = arith.subf %11, %12 : vector<1x64xf32>
    %cst_7 = arith.constant 0.000000e+00 : f32
    %14 = vector.broadcast %cst_7 : f32 to vector<1x64xf32>
    %15 = arith.maximumf %13, %14 : vector<1x64xf32>
    %16 = vector.broadcast %9 : vector<1x64xf32> to vector<8x64xf32>
    %17 = arith.subf %2, %16 : vector<8x64xf32>
    %cst_8 = arith.constant 9.99999974E-6 : f32
    %18 = vector.broadcast %cst_8 : f32 to vector<1x64xf32>
    %19 = arith.addf %15, %18 : vector<1x64xf32>
    %20 = math.rsqrt %19 : vector<1x64xf32>
    %21 = vector.broadcast %20 : vector<1x64xf32> to vector<8x64xf32>
    %22 = arith.mulf %17, %21 : vector<8x64xf32>
    %cst_9 = arith.constant 0.000000e+00 : f32
    %23 = vector.broadcast %cst_9 : f32 to vector<8x64xf32>
    %24 = arith.maximumf %22, %23 : vector<8x64xf32>
    %c0_10 = arith.constant 0 : index
    %c0_11 = arith.constant 0 : index
    %25 = vector.load %arg2[%c0_10, %c0_11] : memref<64x32xf32, #tpu.memory_space<vmem>>, vector<64x32xf32>
    %cst_12 = arith.constant dense<0.000000e+00> : vector<8x32xf32>
    %26 = tpu.matmul %24, %25, %cst_12 {dimension_numbers = #tpu.dot_dimension_numbers<[1], [0], [0], [1], [0, 0, 1, 1], [], []>} : vector<8x64xf32>, vector<64x32xf32>, vector<8x32xf32> -> vector<8x32xf32>
    %cst_13 = arith.constant dense<0.000000e+00> : vector<32xf32>
    %27 = vector.multi_reduction <add>, %26, %cst_13 [0] : vector<8x32xf32> to vector<32xf32>
    %28 = vector.shape_cast %27 : vector<32xf32> to vector<1x32xf32>
    %29 = arith.mulf %26, %26 : vector<8x32xf32>
    %cst_14 = arith.constant dense<0.000000e+00> : vector<32xf32>
    %30 = vector.multi_reduction <add>, %29, %cst_14 [0] : vector<8x32xf32> to vector<32xf32>
    %31 = vector.shape_cast %30 : vector<32xf32> to vector<1x32xf32>
    %cst_15 = arith.constant 1.250000e-01 : f32
    %32 = vector.broadcast %cst_15 : f32 to vector<1x32xf32>
    %33 = arith.mulf %28, %32 : vector<1x32xf32>
    %cst_16 = arith.constant 1.250000e-01 : f32
    %34 = vector.broadcast %cst_16 : f32 to vector<1x32xf32>
    %35 = arith.mulf %31, %34 : vector<1x32xf32>
    %36 = arith.mulf %33, %33 : vector<1x32xf32>
    %37 = arith.subf %35, %36 : vector<1x32xf32>
    %cst_17 = arith.constant 0.000000e+00 : f32
    %38 = vector.broadcast %cst_17 : f32 to vector<1x32xf32>
    %39 = arith.maximumf %37, %38 : vector<1x32xf32>
    %40 = vector.broadcast %33 : vector<1x32xf32> to vector<8x32xf32>
    %41 = arith.subf %26, %40 : vector<8x32xf32>
    %cst_18 = arith.constant 9.99999974E-6 : f32
    %42 = vector.broadcast %cst_18 : f32 to vector<1x32xf32>
    %43 = arith.addf %39, %42 : vector<1x32xf32>
    %44 = math.rsqrt %43 : vector<1x32xf32>
    %45 = vector.broadcast %44 : vector<1x32xf32> to vector<8x32xf32>
    %46 = arith.mulf %41, %45 : vector<8x32xf32>
    %cst_19 = arith.constant 0.000000e+00 : f32
    %47 = vector.broadcast %cst_19 : f32 to vector<8x32xf32>
    %48 = arith.maximumf %46, %47 : vector<8x32xf32>
    %c0_20 = arith.constant 0 : index
    %c0_21 = arith.constant 0 : index
    %49 = vector.load %arg3[%c0_20, %c0_21] : memref<32x16xf32, #tpu.memory_space<vmem>>, vector<32x16xf32>
    %cst_22 = arith.constant dense<0.000000e+00> : vector<8x16xf32>
    %50 = tpu.matmul %48, %49, %cst_22 {dimension_numbers = #tpu.dot_dimension_numbers<[1], [0], [0], [1], [0, 0, 1, 1], [], []>} : vector<8x32xf32>, vector<32x16xf32>, vector<8x16xf32> -> vector<8x16xf32>
    %c0_23 = arith.constant 0 : index
    %c0_24 = arith.constant 0 : index
    %51 = vector.load %arg4[%c0_23, %c0_24] : memref<1x16xf32, #tpu.memory_space<vmem>>, vector<1x16xf32>
    %52 = vector.broadcast %51 : vector<1x16xf32> to vector<8x16xf32>
    %53 = arith.addf %50, %52 : vector<8x16xf32>
    %c0_25 = arith.constant 0 : index
    %c0_26 = arith.constant 0 : index
    %54 = vector.load %arg5[%c0_25, %c0_26] : memref<16x32xf32, #tpu.memory_space<vmem>>, vector<16x32xf32>
    %cst_27 = arith.constant dense<0.000000e+00> : vector<8x32xf32>
    %55 = tpu.matmul %53, %54, %cst_27 {dimension_numbers = #tpu.dot_dimension_numbers<[1], [0], [0], [1], [0, 0, 1, 1], [], []>} : vector<8x16xf32>, vector<16x32xf32>, vector<8x32xf32> -> vector<8x32xf32>
    %cst_28 = arith.constant dense<0.000000e+00> : vector<32xf32>
    %56 = vector.multi_reduction <add>, %55, %cst_28 [0] : vector<8x32xf32> to vector<32xf32>
    %57 = vector.shape_cast %56 : vector<32xf32> to vector<1x32xf32>
    %58 = arith.mulf %55, %55 : vector<8x32xf32>
    %cst_29 = arith.constant dense<0.000000e+00> : vector<32xf32>
    %59 = vector.multi_reduction <add>, %58, %cst_29 [0] : vector<8x32xf32> to vector<32xf32>
    %60 = vector.shape_cast %59 : vector<32xf32> to vector<1x32xf32>
    %cst_30 = arith.constant 1.250000e-01 : f32
    %61 = vector.broadcast %cst_30 : f32 to vector<1x32xf32>
    %62 = arith.mulf %57, %61 : vector<1x32xf32>
    %cst_31 = arith.constant 1.250000e-01 : f32
    %63 = vector.broadcast %cst_31 : f32 to vector<1x32xf32>
    %64 = arith.mulf %60, %63 : vector<1x32xf32>
    %65 = arith.mulf %62, %62 : vector<1x32xf32>
    %66 = arith.subf %64, %65 : vector<1x32xf32>
    %cst_32 = arith.constant 0.000000e+00 : f32
    %67 = vector.broadcast %cst_32 : f32 to vector<1x32xf32>
    %68 = arith.maximumf %66, %67 : vector<1x32xf32>
    %69 = vector.broadcast %62 : vector<1x32xf32> to vector<8x32xf32>
    %70 = arith.subf %55, %69 : vector<8x32xf32>
    %cst_33 = arith.constant 9.99999974E-6 : f32
    %71 = vector.broadcast %cst_33 : f32 to vector<1x32xf32>
    %72 = arith.addf %68, %71 : vector<1x32xf32>
    %73 = math.rsqrt %72 : vector<1x32xf32>
    %74 = vector.broadcast %73 : vector<1x32xf32> to vector<8x32xf32>
    %75 = arith.mulf %70, %74 : vector<8x32xf32>
    %cst_34 = arith.constant 0.000000e+00 : f32
    %76 = vector.broadcast %cst_34 : f32 to vector<8x32xf32>
    %77 = arith.maximumf %75, %76 : vector<8x32xf32>
    %c0_35 = arith.constant 0 : index
    %c0_36 = arith.constant 0 : index
    %78 = vector.load %arg6[%c0_35, %c0_36] : memref<32x64xf32, #tpu.memory_space<vmem>>, vector<32x64xf32>
    %cst_37 = arith.constant dense<0.000000e+00> : vector<8x64xf32>
    %79 = tpu.matmul %77, %78, %cst_37 {dimension_numbers = #tpu.dot_dimension_numbers<[1], [0], [0], [1], [0, 0, 1, 1], [], []>} : vector<8x32xf32>, vector<32x64xf32>, vector<8x64xf32> -> vector<8x64xf32>
    %cst_38 = arith.constant dense<0.000000e+00> : vector<64xf32>
    %80 = vector.multi_reduction <add>, %79, %cst_38 [0] : vector<8x64xf32> to vector<64xf32>
    %81 = vector.shape_cast %80 : vector<64xf32> to vector<1x64xf32>
    %82 = arith.mulf %79, %79 : vector<8x64xf32>
    %cst_39 = arith.constant dense<0.000000e+00> : vector<64xf32>
    %83 = vector.multi_reduction <add>, %82, %cst_39 [0] : vector<8x64xf32> to vector<64xf32>
    %84 = vector.shape_cast %83 : vector<64xf32> to vector<1x64xf32>
    %cst_40 = arith.constant 1.250000e-01 : f32
    %85 = vector.broadcast %cst_40 : f32 to vector<1x64xf32>
    %86 = arith.mulf %81, %85 : vector<1x64xf32>
    %cst_41 = arith.constant 1.250000e-01 : f32
    %87 = vector.broadcast %cst_41 : f32 to vector<1x64xf32>
    %88 = arith.mulf %84, %87 : vector<1x64xf32>
    %89 = arith.mulf %86, %86 : vector<1x64xf32>
    %90 = arith.subf %88, %89 : vector<1x64xf32>
    %cst_42 = arith.constant 0.000000e+00 : f32
    %91 = vector.broadcast %cst_42 : f32 to vector<1x64xf32>
    %92 = arith.maximumf %90, %91 : vector<1x64xf32>
    %93 = vector.broadcast %86 : vector<1x64xf32> to vector<8x64xf32>
    %94 = arith.subf %79, %93 : vector<8x64xf32>
    %cst_43 = arith.constant 9.99999974E-6 : f32
    %95 = vector.broadcast %cst_43 : f32 to vector<1x64xf32>
    %96 = arith.addf %92, %95 : vector<1x64xf32>
    %97 = math.rsqrt %96 : vector<1x64xf32>
    %98 = vector.broadcast %97 : vector<1x64xf32> to vector<8x64xf32>
    %99 = arith.mulf %94, %98 : vector<8x64xf32>
    %cst_44 = arith.constant 0.000000e+00 : f32
    %100 = vector.broadcast %cst_44 : f32 to vector<8x64xf32>
    %101 = arith.maximumf %99, %100 : vector<8x64xf32>
    %c0_45 = arith.constant 0 : index
    %c0_46 = arith.constant 0 : index
    %102 = vector.load %arg7[%c0_45, %c0_46] : memref<64x32xf32, #tpu.memory_space<vmem>>, vector<64x32xf32>
    %cst_47 = arith.constant dense<0.000000e+00> : vector<8x32xf32>
    %103 = tpu.matmul %101, %102, %cst_47 {dimension_numbers = #tpu.dot_dimension_numbers<[1], [0], [0], [1], [0, 0, 1, 1], [], []>} : vector<8x64xf32>, vector<64x32xf32>, vector<8x32xf32> -> vector<8x32xf32>
    %c0_48 = arith.constant 0 : index
    %c0_49 = arith.constant 0 : index
    %104 = vector.load %arg8[%c0_48, %c0_49] : memref<1x32xf32, #tpu.memory_space<vmem>>, vector<1x32xf32>
    %105 = vector.broadcast %104 : vector<1x32xf32> to vector<8x32xf32>
    %106 = arith.addf %103, %105 : vector<8x32xf32>
    %107 = math.tanh %106 : vector<8x32xf32>
    %c0_50 = arith.constant 0 : index
    %c0_51 = arith.constant 0 : index
    %108 = vector.load %arg9[%c0_50, %c0_51] : memref<8x32xf32, #tpu.memory_space<vmem>>, vector<8x32xf32>
    tpu.vector_store %arg9[%c0_50, %c0_51], %107 {strides = array<i32>} : memref<8x32xf32, #tpu.memory_space<vmem>>, vector<8x32xf32>,
    return
  }
}

</mosaic_0001>

<llo_original>
// kernel: tpu_custom_call.1
$region0: #{tpu_custom_call.1}
  #allocation0 [shape = 'u32[]', space=smem, size = 0x4, offset = 0x4, fixed_abs, tag = 'smem constant byte address 0x4 - core index']
  #allocation1 [shape = 'u32[144,128]{1,0:T(1,128)}', space=vmem, size = 0x12000, scoped, tag = 'internal scratch']
  %s0 = inlined_call_operand.vmem [shape: f32[8,32], index: 0, kind: input, shape index: {}]
  %s1 = inlined_call_operand.vmem [shape: f32[32,64], index: 1, kind: input, shape index: {}]
  %s2 = inlined_call_operand.vmem [shape: f32[64,32], index: 2, kind: input, shape index: {}]
  %s3 = inlined_call_operand.vmem [shape: f32[32,16], index: 3, kind: input, shape index: {}]
  %s4 = inlined_call_operand.vmem [shape: f32[1,16], index: 4, kind: input, shape index: {}]
  %s5 = inlined_call_operand.vmem [shape: f32[16,32], index: 5, kind: input, shape index: {}]
  %s6 = inlined_call_operand.vmem [shape: f32[32,64], index: 6, kind: input, shape index: {}]
  %s7 = inlined_call_operand.vmem [shape: f32[64,32], index: 7, kind: input, shape index: {}]
  %s8 = inlined_call_operand.vmem [shape: f32[1,32], index: 8, kind: input, shape index: {}]
  %s9 = inlined_call_operand.hbm [shape: f32[8,32], index: 9, kind: output, shape index: {}]
  %s10 = sld [smem:[#allocation0]]
  $region46: #{tpu_custom_call.1} parent=0
    _
  %s12 = ssub.s32 1, %s10
  %s13 = scalar_select 0, %s12, %s10
  $region1: #{tpu_custom_call.1} parent=0
    #allocation2 [shape = 'u8[4096]{0}', space=vmem, size = 0x1000, scoped, tag = 'output window, operand 0, single buffered']
    #allocation3 [shape = 's32[1]{0}', space=sflag, size = 0x4, scoped, tag = 'scoped memory for tpu_custom_call.1']
    %14 = vsyncpa [#allocation3], 0
    // Predicated region
    $region2: #{tpu_custom_call.1} parent=1 // pred_check
      _
    $region3: #{tpu_custom_call.1} parent=1 // pred_check_branch
      %16 = sbr.rel (0) target = $region5
    $region4: #{tpu_custom_call.1} parent=1 // pred_region
      _
    $region5: #{tpu_custom_call.1} parent=1 // pred_fallthru
      _
    // Predicated region
    $region6: #{tpu_custom_call.1} parent=1 // pred_check
      _
    $region7: #{tpu_custom_call.1} parent=1 // pred_check_branch
      %18 = sbr.rel (0) target = $region9
    $region8: #{tpu_custom_call.1} parent=1 // pred_region
      _
    $region9: #{tpu_custom_call.1} parent=1 // pred_fallthru
      _
    // Predicated region
    $region10: #{tpu_custom_call.1} parent=1 // pred_check
      _
    $region11: #{tpu_custom_call.1} parent=1 // pred_check_branch
      %20 = sbr.rel (0) target = $region13
    $region12: #{tpu_custom_call.1} parent=1 // pred_region
      _
    $region13: #{tpu_custom_call.1} parent=1 // pred_fallthru
      _
    // Predicated region
    $region14: #{tpu_custom_call.1} parent=1 // pred_check
      _
    $region15: #{tpu_custom_call.1} parent=1 // pred_check_branch
      %22 = sbr.rel (0) target = $region17
    $region16: #{tpu_custom_call.1} parent=1 // pred_region
      _
    $region17: #{tpu_custom_call.1} parent=1 // pred_fallthru
      _
    // Predicated region
    $region18: #{tpu_custom_call.1} parent=1 // pred_check
      _
    $region19: #{tpu_custom_call.1} parent=1 // pred_check_branch
      %24 = sbr.rel (0) target = $region21
    $region20: #{tpu_custom_call.1} parent=1 // pred_region
      _
    $region21: #{tpu_custom_call.1} parent=1 // pred_fallthru
      _
    // Predicated region
    $region22: #{tpu_custom_call.1} parent=1 // pred_check
      _
    $region23: #{tpu_custom_call.1} parent=1 // pred_check_branch
      %26 = sbr.rel (0) target = $region25
    $region24: #{tpu_custom_call.1} parent=1 // pred_region
      _
    $region25: #{tpu_custom_call.1} parent=1 // pred_fallthru
      _
    // Predicated region
    $region26: #{tpu_custom_call.1} parent=1 // pred_check
      _
    $region27: #{tpu_custom_call.1} parent=1 // pred_check_branch
      %28 = sbr.rel (0) target = $region29
    $region28: #{tpu_custom_call.1} parent=1 // pred_region
      _
    $region29: #{tpu_custom_call.1} parent=1 // pred_fallthru
      _
    // Predicated region
    $region30: #{tpu_custom_call.1} parent=1 // pred_check
      _
    $region31: #{tpu_custom_call.1} parent=1 // pred_check_branch
      %30 = sbr.rel (0) target = $region33
    $region32: #{tpu_custom_call.1} parent=1 // pred_region
      _
    $region33: #{tpu_custom_call.1} parent=1 // pred_fallthru
      _
    // Predicated region
    $region34: #{tpu_custom_call.1} parent=1 // pred_check
      _
    $region35: #{tpu_custom_call.1} parent=1 // pred_check_branch
      %32 = sbr.rel (0) target = $region37
    $region36: #{tpu_custom_call.1} parent=1 // pred_region
      _
    $region37: #{tpu_custom_call.1} parent=1 // pred_fallthru
      _
    %v33 = vld [vmem:[%s0] sm:$0xff]
    %v34 = vld [vmem:[%s1] sm:$0xff]
    %v35 = vld [vmem:[%s1 + $0x8] sm:$0xff]
    %v36 = vld [vmem:[%s1 + $0x10] sm:$0xff]
    %v37 = vld [vmem:[%s1 + $0x18] sm:$0xff]
    %vm38 = vcmask 261120
    %v40 = vsel %vm38, %v33, 0
    %42 = vmatprep.subr.mxu0 0.0
    %43 = vmatpush1.msra.mxu0 0.0
    %44 = vmatprep.subr.mxu0 0.0
    %45 = vmatpush1.msra.mxu0 0.0
    %46 = vmatprep.subr.mxu0 0.0
    %47 = vmatpush1.msra.mxu0 0.0
    %48 = vmatprep.subr.mxu0 0.0
    %49 = vmatpush1.msra.mxu0 0.0
    %50 = vmatprep.subr.mxu0 0.0
    %51 = vmatpush1.msra.mxu0 0.0
    %52 = vmatprep.subr.mxu0 0.0
    %53 = vmatpush1.msra.mxu0 0.0
    %54 = vmatprep.subr.mxu0 0.0
    %55 = vmatpush1.msra.mxu0 0.0
    %56 = vmatprep.subr.mxu0 0.0
    %57 = vmatpush1.msra.mxu0 0.0
    %58 = vmatprep.subr.mxu0 0.0
    %59 = vmatpush1.msra.mxu0 0.0
    %60 = vmatprep.subr.mxu0 0.0
    %61 = vmatpush1.msra.mxu0 0.0
    %62 = vmatprep.subr.mxu0 0.0
    %63 = vmatpush1.msra.mxu0 0.0
    %64 = vmatprep.subr.mxu0 0.0
    %65 = vmatpush1.msra.mxu0 0.0
    %66 = vmatprep.subr.mxu0 0.0
    %67 = vmatpush1.msra.mxu0 %v37
    %68 = vmatprep.subr.mxu0 0.0
    %69 = vmatpush1.msra.mxu0 %v36
    %70 = vmatprep.subr.mxu0 0.0
    %71 = vmatpush1.msra.mxu0 %v35
    %72 = vmatprep.subr.mxu0 0.0
    %73 = vmatpush1.msra.mxu0 %v34
    %74 = vmatprep.subr.mxu0 0.0
    %75 = vmatpush2.msra.mxu0 0.0
    %76 = vmatprep.subr.mxu0 0.0
    %77 = vmatpush2.msra.mxu0 0.0
    %78 = vmatprep.subr.mxu0 0.0
    %79 = vmatpush2.msra.mxu0 0.0
    %80 = vmatprep.subr.mxu0 0.0
    %81 = vmatpush2.msra.mxu0 0.0
    %82 = vmatprep.subr.mxu0 0.0
    %83 = vmatpush2.msra.mxu0 0.0
    %84 = vmatprep.subr.mxu0 0.0
    %85 = vmatpush2.msra.mxu0 0.0
    %86 = vmatprep.subr.mxu0 0.0
    %87 = vmatpush2.msra.mxu0 0.0
    %88 = vmatprep.subr.mxu0 0.0
    %89 = vmatpush2.msra.mxu0 0.0
    %90 = vmatprep.subr.mxu0 0.0
    %91 = vmatpush2.msra.mxu0 0.0
    %92 = vmatprep.subr.mxu0 0.0
    %93 = vmatpush2.msra.mxu0 0.0
    %94 = vmatprep.subr.mxu0 0.0
    %95 = vmatpush2.msra.mxu0 0.0
    %96 = vmatprep.subr.mxu0 0.0
    %97 = vmatpush2.msra.mxu0 0.0
    %98 = vmatprep.subr.mxu0 0.0
    %99 = vmatpush2.msra.mxu0 0.0
    %100 = vmatprep.subr.mxu0 0.0
    %101 = vmatpush2.msra.mxu0 0.0
    %102 = vmatprep.subr.mxu0 0.0
    %103 = vmatpush2.msra.mxu0 0.0
    %104 = vmatprep.subr.mxu0 0.0
    %105 = vmatpush2.msra.mxu0 0.0
    %106 = vmatprep.mubr.f32.mxu0 0.0
    %107 = vmatmul.mubr.f32.gmra.mxu0 %v40
    %v108 = vpop.f32.mrf.mxu0
    %v109 = vadd.f32 0.0, %v108
    %v110 = vpop.f32.mrf.mxu0
    %111 = vdwg.mxu0
    %vm112 = vcmask 523264
    %v113 = vsel %vm112, %v109, 0.0
    %v114 = vrot.slane %v113, 4
    %v115 = vadd.f32 %v113, %v114
    %v116 = vrot.slane %v115, 2
    %v117 = vadd.f32 %v115, %v116
    %v118 = vrot.slane %v117, 1
    %v119 = vadd.f32 %v117, %v118
    %v120 = vmul.f32 %v109, %v109
    %v121 = vsel %vm112, %v120, 0.0
    %v122 = vrot.slane %v121, 4
    %v123 = vadd.f32 %v121, %v122
    %v124 = vrot.slane %v123, 2
    %v125 = vadd.f32 %v123, %v124
    %v126 = vrot.slane %v125, 1
    %v127 = vadd.f32 %v125, %v126
    %v128 = vmul.f32 %v119, 0.125
    %v129 = vmul.f32 %v127, 0.125
    %v130 = vmul.f32 %v128, %v128
    %v131 = vsub.f32 %v129, %v130
    %v132 = vmax.f32 %v131, 0.0
    %v133 = vsub.f32 %v109, %v128
    %v134 = vadd.f32 %v132, 1e-05
    %v135 = vrsqrt.pop %v134
    %v136 = vmul.f32 %v133, %v135
    %v137 = vmax.f32 %v136, 0.0
    %v138 = vld [vmem:[%s2] sm:$0xff]
    %v139 = vld [vmem:[%s2 + $0x8] sm:$0xff]
    %v140 = vld [vmem:[%s2 + $0x10] sm:$0xff]
    %v141 = vld [vmem:[%s2 + $0x18] sm:$0xff]
    %v142 = vld [vmem:[%s2 + $0x20] sm:$0xff]
    %v143 = vld [vmem:[%s2 + $0x28] sm:$0xff]
    %v144 = vld [vmem:[%s2 + $0x30] sm:$0xff]
    %v145 = vld [vmem:[%s2 + $0x38] sm:$0xff]
    %v147 = vsel %vm112, %v137, 0
    %149 = vmatprep.subr.mxu0 0.0
    %150 = vmatpush1.msra.mxu0 0.0
    %151 = vmatprep.subr.mxu0 0.0
    %152 = vmatpush1.msra.mxu0 0.0
    %153 = vmatprep.subr.mxu0 0.0
    %154 = vmatpush1.msra.mxu0 0.0
    %155 = vmatprep.subr.mxu0 0.0
    %156 = vmatpush1.msra.mxu0 0.0
    %157 = vmatprep.subr.mxu0 0.0
    %158 = vmatpush1.msra.mxu0 0.0
    %159 = vmatprep.subr.mxu0 0.0
    %160 = vmatpush1.msra.mxu0 0.0
    %161 = vmatprep.subr.mxu0 0.0
    %162 = vmatpush1.msra.mxu0 0.0
    %163 = vmatprep.subr.mxu0 0.0
    %164 = vmatpush1.msra.mxu0 0.0
    %165 = vmatprep.subr.mxu0 0.0
    %166 = vmatpush1.msra.mxu0 %v145
    %167 = vmatprep.subr.mxu0 0.0
    %168 = vmatpush1.msra.mxu0 %v144
    %169 = vmatprep.subr.mxu0 0.0
    %170 = vmatpush1.msra.mxu0 %v143
    %171 = vmatprep.subr.mxu0 0.0
    %172 = vmatpush1.msra.mxu0 %v142
    %173 = vmatprep.subr.mxu0 0.0
    %174 = vmatpush1.msra.mxu0 %v141
    %175 = vmatprep.subr.mxu0 0.0
    %176 = vmatpush1.msra.mxu0 %v140
    %177 = vmatprep.subr.mxu0 0.0
    %178 = vmatpush1.msra.mxu0 %v139
    %179 = vmatprep.subr.mxu0 0.0
    %180 = vmatpush1.msra.mxu0 %v138
    %181 = vmatprep.subr.mxu0 0.0
    %182 = vmatpush2.msra.mxu0 0.0
    %183 = vmatprep.subr.mxu0 0.0
    %184 = vmatpush2.msra.mxu0 0.0
    %185 = vmatprep.subr.mxu0 0.0
    %186 = vmatpush2.msra.mxu0 0.0
    %187 = vmatprep.subr.mxu0 0.0
    %188 = vmatpush2.msra.mxu0 0.0
    %189 = vmatprep.subr.mxu0 0.0
    %190 = vmatpush2.msra.mxu0 0.0
    %191 = vmatprep.subr.mxu0 0.0
    %192 = vmatpush2.msra.mxu0 0.0
    %193 = vmatprep.subr.mxu0 0.0
    %194 = vmatpush2.msra.mxu0 0.0
    %195 = vmatprep.subr.mxu0 0.0
    %196 = vmatpush2.msra.mxu0 0.0
    %197 = vmatprep.subr.mxu0 0.0
    %198 = vmatpush2.msra.mxu0 0.0
    %199 = vmatprep.subr.mxu0 0.0
    %200 = vmatpush2.msra.mxu0 0.0
    %201 = vmatprep.subr.mxu0 0.0
    %202 = vmatpush2.msra.mxu0 0.0
    %203 = vmatprep.subr.mxu0 0.0
    %204 = vmatpush2.msra.mxu0 0.0
    %205 = vmatprep.subr.mxu0 0.0
    %206 = vmatpush2.msra.mxu0 0.0
    %207 = vmatprep.subr.mxu0 0.0
    %208 = vmatpush2.msra.mxu0 0.0
    %209 = vmatprep.subr.mxu0 0.0
    %210 = vmatpush2.msra.mxu0 0.0
    %211 = vmatprep.subr.mxu0 0.0
    %212 = vmatpush2.msra.mxu0 0.0
    %213 = vmatprep.mubr.f32.mxu0 0.0
    %214 = vmatmul.mubr.f32.gmra.mxu0 %v147
    %v215 = vpop.f32.mrf.mxu0
    %v216 = vadd.f32 0.0, %v215
    %v217 = vpop.f32.mrf.mxu0
    %218 = vdwg.mxu0
    %v219 = vsel %vm38, %v216, 0.0
    %v220 = vrot.slane %v219, 4
    %v221 = vadd.f32 %v219, %v220
    %v222 = vrot.slane %v221, 2
    %v223 = vadd.f32 %v221, %v222
    %v224 = vrot.slane %v223, 1
    %v225 = vadd.f32 %v223, %v224
    %v226 = vmul.f32 %v216, %v216
    %v227 = vsel %vm38, %v226, 0.0
    %v228 = vrot.slane %v227, 4
    %v229 = vadd.f32 %v227, %v228
    %v230 = vrot.slane %v229, 2
    %v231 = vadd.f32 %v229, %v230
    %v232 = vrot.slane %v231, 1
    %v233 = vadd.f32 %v231, %v232
    %v234 = vmul.f32 %v225, 0.125
    %v235 = vmul.f32 %v233, 0.125
    %v236 = vmul.f32 %v234, %v234
    %v237 = vsub.f32 %v235, %v236
    %v238 = vmax.f32 %v237, 0.0
    %v239 = vsub.f32 %v216, %v234
    %v240 = vadd.f32 %v238, 1e-05
    %v241 = vrsqrt.pop %v240
    %v242 = vmul.f32 %v239, %v241
    %v243 = vmax.f32 %v242, 0.0
    %v244 = vld [vmem:[%s3] sm:$0xff]
    %v245 = vld [vmem:[%s3 + $0x8] sm:$0xff]
    %v246 = vld [vmem:[%s3 + $0x10] sm:$0xff]
    %v247 = vld [vmem:[%s3 + $0x18] sm:$0xff]
    %v248 = vld [vmem:[%s4] sm:$0x1]
    %v250 = vlaneseq
    %v251 = vshrl.u32 %v250, 7
    %v252 = vsub.s32 0, %v251
    %v253 = vrot.slane %v248, %v252
    %v256 = vsel %vm38, %v243, 0
    %258 = vmatprep.subr.mxu0 0.0
    %259 = vmatpush1.msra.mxu0 0.0
    %260 = vmatprep.subr.mxu0 0.0
    %261 = vmatpush1.msra.mxu0 0.0
    %262 = vmatprep.subr.mxu0 0.0
    %263 = vmatpush1.msra.mxu0 0.0
    %264 = vmatprep.subr.mxu0 0.0
    %265 = vmatpush1.msra.mxu0 0.0
    %266 = vmatprep.subr.mxu0 0.0
    %267 = vmatpush1.msra.mxu0 0.0
    %268 = vmatprep.subr.mxu0 0.0
    %269 = vmatpush1.msra.mxu0 0.0
    %270 = vmatprep.subr.mxu0 0.0
    %271 = vmatpush1.msra.mxu0 0.0
    %272 = vmatprep.subr.mxu0 0.0
    %273 = vmatpush1.msra.mxu0 0.0
    %274 = vmatprep.subr.mxu0 0.0
    %275 = vmatpush1.msra.mxu0 0.0
    %276 = vmatprep.subr.mxu0 0.0
    %277 = vmatpush1.msra.mxu0 0.0
    %278 = vmatprep.subr.mxu0 0.0
    %279 = vmatpush1.msra.mxu0 0.0
    %280 = vmatprep.subr.mxu0 0.0
    %281 = vmatpush1.msra.mxu0 0.0
    %282 = vmatprep.subr.mxu0 0.0
    %283 = vmatpush1.msra.mxu0 %v247
    %284 = vmatprep.subr.mxu0 0.0
    %285 = vmatpush1.msra.mxu0 %v246
    %286 = vmatprep.subr.mxu0 0.0
    %287 = vmatpush1.msra.mxu0 %v245
    %288 = vmatprep.subr.mxu0 0.0
    %289 = vmatpush1.msra.mxu0 %v244
    %290 = vmatprep.subr.mxu0 0.0
    %291 = vmatpush2.msra.mxu0 0.0
    %292 = vmatprep.subr.mxu0 0.0
    %293 = vmatpush2.msra.mxu0 0.0
    %294 = vmatprep.subr.mxu0 0.0
    %295 = vmatpush2.msra.mxu0 0.0
    %296 = vmatprep.subr.mxu0 0.0
    %297 = vmatpush2.msra.mxu0 0.0
    %298 = vmatprep.subr.mxu0 0.0
    %299 = vmatpush2.msra.mxu0 0.0
    %300 = vmatprep.subr.mxu0 0.0
    %301 = vmatpush2.msra.mxu0 0.0
    %302 = vmatprep.subr.mxu0 0.0
    %303 = vmatpush2.msra.mxu0 0.0
    %304 = vmatprep.subr.mxu0 0.0
    %305 = vmatpush2.msra.mxu0 0.0
    %306 = vmatprep.subr.mxu0 0.0
    %307 = vmatpush2.msra.mxu0 0.0
    %308 = vmatprep.subr.mxu0 0.0
    %309 = vmatpush2.msra.mxu0 0.0
    %310 = vmatprep.subr.mxu0 0.0
    %311 = vmatpush2.msra.mxu0 0.0
    %312 = vmatprep.subr.mxu0 0.0
    %313 = vmatpush2.msra.mxu0 0.0
    %314 = vmatprep.subr.mxu0 0.0
    %315 = vmatpush2.msra.mxu0 0.0
    %316 = vmatprep.subr.mxu0 0.0
    %317 = vmatpush2.msra.mxu0 0.0
    %318 = vmatprep.subr.mxu0 0.0
    %319 = vmatpush2.msra.mxu0 0.0
    %320 = vmatprep.subr.mxu0 0.0
    %321 = vmatpush2.msra.mxu0 0.0
    %322 = vmatprep.mubr.f32.mxu0 0.0
    %323 = vmatmul.mubr.f32.gmra.mxu0 %v256
    %v324 = vpop.f32.mrf.mxu0
    %v325 = vadd.f32 %v253, %v324
    %v326 = vpop.f32.mrf.mxu0
    %327 = vdwg.mxu0
    %v328 = vld [vmem:[%s5] sm:$0xff]
    %v329 = vld [vmem:[%s5 + $0x8] sm:$0xff]
    %vm330 = vcmask 130048
    %v332 = vsel %vm330, %v325, 0
    %334 = vmatprep.subr.mxu0 0.0
    %335 = vmatpush1.msra.mxu0 0.0
    %336 = vmatprep.subr.mxu0 0.0
    %337 = vmatpush1.msra.mxu0 0.0
    %338 = vmatprep.subr.mxu0 0.0
    %339 = vmatpush1.msra.mxu0 0.0
    %340 = vmatprep.subr.mxu0 0.0
    %341 = vmatpush1.msra.mxu0 0.0
    %342 = vmatprep.subr.mxu0 0.0
    %343 = vmatpush1.msra.mxu0 0.0
    %344 = vmatprep.subr.mxu0 0.0
    %345 = vmatpush1.msra.mxu0 0.0
    %346 = vmatprep.subr.mxu0 0.0
    %347 = vmatpush1.msra.mxu0 0.0
    %348 = vmatprep.subr.mxu0 0.0
    %349 = vmatpush1.msra.mxu0 0.0
    %350 = vmatprep.subr.mxu0 0.0
    %351 = vmatpush1.msra.mxu0 0.0
    %352 = vmatprep.subr.mxu0 0.0
    %353 = vmatpush1.msra.mxu0 0.0
    %354 = vmatprep.subr.mxu0 0.0
    %355 = vmatpush1.msra.mxu0 0.0
    %356 = vmatprep.subr.mxu0 0.0
    %357 = vmatpush1.msra.mxu0 0.0
    %358 = vmatprep.subr.mxu0 0.0
    %359 = vmatpush1.msra.mxu0 0.0
    %360 = vmatprep.subr.mxu0 0.0
    %361 = vmatpush1.msra.mxu0 0.0
    %362 = vmatprep.subr.mxu0 0.0
    %363 = vmatpush1.msra.mxu0 %v329
    %364 = vmatprep.subr.mxu0 0.0
    %365 = vmatpush1.msra.mxu0 %v328
    %366 = vmatprep.subr.mxu0 0.0
    %367 = vmatpush2.msra.mxu0 0.0
    %368 = vmatprep.subr.mxu0 0.0
    %369 = vmatpush2.msra.mxu0 0.0
    %370 = vmatprep.subr.mxu0 0.0
    %371 = vmatpush2.msra.mxu0 0.0
    %372 = vmatprep.subr.mxu0 0.0
    %373 = vmatpush2.msra.mxu0 0.0
    %374 = vmatprep.subr.mxu0 0.0
    %375 = vmatpush2.msra.mxu0 0.0
    %376 = vmatprep.subr.mxu0 0.0
    %377 = vmatpush2.msra.mxu0 0.0
    %378 = vmatprep.subr.mxu0 0.0
    %379 = vmatpush2.msra.mxu0 0.0
    %380 = vmatprep.subr.mxu0 0.0
    %381 = vmatpush2.msra.mxu0 0.0
    %382 = vmatprep.subr.mxu0 0.0
    %383 = vmatpush2.msra.mxu0 0.0
    %384 = vmatprep.subr.mxu0 0.0
    %385 = vmatpush2.msra.mxu0 0.0
    %386 = vmatprep.subr.mxu0 0.0
    %387 = vmatpush2.msra.mxu0 0.0
    %388 = vmatprep.subr.mxu0 0.0
    %389 = vmatpush2.msra.mxu0 0.0
    %390 = vmatprep.subr.mxu0 0.0
    %391 = vmatpush2.msra.mxu0 0.0
    %392 = vmatprep.subr.mxu0 0.0
    %393 = vmatpush2.msra.mxu0 0.0
    %394 = vmatprep.subr.mxu0 0.0
    %395 = vmatpush2.msra.mxu0 0.0
    %396 = vmatprep.subr.mxu0 0.0
    %397 = vmatpush2.msra.mxu0 0.0
    %398 = vmatprep.mubr.f32.mxu0 0.0
    %399 = vmatmul.mubr.f32.gmra.mxu0 %v332
    %v400 = vpop.f32.mrf.mxu0
    %v401 = vadd.f32 0.0, %v400
    %v402 = vpop.f32.mrf.mxu0
    %403 = vdwg.mxu0
    %v404 = vsel %vm38, %v401, 0.0
    %v405 = vrot.slane %v404, 4
    %v406 = vadd.f32 %v404, %v405
    %v407 = vrot.slane %v406, 2
    %v408 = vadd.f32 %v406, %v407
    %v409 = vrot.slane %v408, 1
    %v410 = vadd.f32 %v408, %v409
    %v411 = vmul.f32 %v401, %v401
    %v412 = vsel %vm38, %v411, 0.0
    %v413 = vrot.slane %v412, 4
    %v414 = vadd.f32 %v412, %v413
    %v415 = vrot.slane %v414, 2
    %v416 = vadd.f32 %v414, %v415
    %v417 = vrot.slane %v416, 1
    %v418 = vadd.f32 %v416, %v417
    %v419 = vmul.f32 %v410, 0.125
    %v420 = vmul.f32 %v418, 0.125
    %v421 = vmul.f32 %v419, %v419
    %v422 = vsub.f32 %v420, %v421
    %v423 = vmax.f32 %v422, 0.0
    %v424 = vsub.f32 %v401, %v419
    %v425 = vadd.f32 %v423, 1e-05
    %v426 = vrsqrt.pop %v425
    %v427 = vmul.f32 %v424, %v426
    %v428 = vmax.f32 %v427, 0.0
    %v429 = vld [vmem:[%s6] sm:$0xff]
    %v430 = vld [vmem:[%s6 + $0x8] sm:$0xff]
    %v431 = vld [vmem:[%s6 + $0x10] sm:$0xff]
    %v432 = vld [vmem:[%s6 + $0x18] sm:$0xff]
    %v434 = vsel %vm38, %v428, 0
    %436 = vmatprep.subr.mxu0 0.0
    %437 = vmatpush1.msra.mxu0 0.0
    %438 = vmatprep.subr.mxu0 0.0
    %439 = vmatpush1.msra.mxu0 0.0
    %440 = vmatprep.subr.mxu0 0.0
    %441 = vmatpush1.msra.mxu0 0.0
    %442 = vmatprep.subr.mxu0 0.0
    %443 = vmatpush1.msra.mxu0 0.0
    %444 = vmatprep.subr.mxu0 0.0
    %445 = vmatpush1.msra.mxu0 0.0
    %446 = vmatprep.subr.mxu0 0.0
    %447 = vmatpush1.msra.mxu0 0.0
    %448 = vmatprep.subr.mxu0 0.0
    %449 = vmatpush1.msra.mxu0 0.0
    %450 = vmatprep.subr.mxu0 0.0
    %451 = vmatpush1.msra.mxu0 0.0
    %452 = vmatprep.subr.mxu0 0.0
    %453 = vmatpush1.msra.mxu0 0.0
    %454 = vmatprep.subr.mxu0 0.0
    %455 = vmatpush1.msra.mxu0 0.0
    %456 = vmatprep.subr.mxu0 0.0
    %457 = vmatpush1.msra.mxu0 0.0
    %458 = vmatprep.subr.mxu0 0.0
    %459 = vmatpush1.msra.mxu0 0.0
    %460 = vmatprep.subr.mxu0 0.0
    %461 = vmatpush1.msra.mxu0 %v432
    %462 = vmatprep.subr.mxu0 0.0
    %463 = vmatpush1.msra.mxu0 %v431
    %464 = vmatprep.subr.mxu0 0.0
    %465 = vmatpush1.msra.mxu0 %v430
    %466 = vmatprep.subr.mxu0 0.0
    %467 = vmatpush1.msra.mxu0 %v429
    %468 = vmatprep.subr.mxu0 0.0
    %469 = vmatpush2.msra.mxu0 0.0
    %470 = vmatprep.subr.mxu0 0.0
    %471 = vmatpush2.msra.mxu0 0.0
    %472 = vmatprep.subr.mxu0 0.0
    %473 = vmatpush2.msra.mxu0 0.0
    %474 = vmatprep.subr.mxu0 0.0
    %475 = vmatpush2.msra.mxu0 0.0
    %476 = vmatprep.subr.mxu0 0.0
    %477 = vmatpush2.msra.mxu0 0.0
    %478 = vmatprep.subr.mxu0 0.0
    %479 = vmatpush2.msra.mxu0 0.0
    %480 = vmatprep.subr.mxu0 0.0
    %481 = vmatpush2.msra.mxu0 0.0
    %482 = vmatprep.subr.mxu0 0.0
    %483 = vmatpush2.msra.mxu0 0.0
    %484 = vmatprep.subr.mxu0 0.0
    %485 = vmatpush2.msra.mxu0 0.0
    %486 = vmatprep.subr.mxu0 0.0
    %487 = vmatpush2.msra.mxu0 0.0
    %488 = vmatprep.subr.mxu0 0.0
    %489 = vmatpush2.msra.mxu0 0.0
    %490 = vmatprep.subr.mxu0 0.0
    %491 = vmatpush2.msra.mxu0 0.0
    %492 = vmatprep.subr.mxu0 0.0
    %493 = vmatpush2.msra.mxu0 0.0
    %494 = vmatprep.subr.mxu0 0.0
    %495 = vmatpush2.msra.mxu0 0.0
    %496 = vmatprep.subr.mxu0 0.0
    %497 = vmatpush2.msra.mxu0 0.0
    %498 = vmatprep.subr.mxu0 0.0
    %499 = vmatpush2.msra.mxu0 0.0
    %500 = vmatprep.mubr.f32.mxu0 0.0
    %501 = vmatmul.mubr.f32.gmra.mxu0 %v434
    %v502 = vpop.f32.mrf.mxu0
    %v503 = vadd.f32 0.0, %v502
    %v504 = vpop.f32.mrf.mxu0
    %505 = vdwg.mxu0
    %v506 = vsel %vm112, %v503, 0.0
    %v507 = vrot.slane %v506, 4
    %v508 = vadd.f32 %v506, %v507
    %v509 = vrot.slane %v508, 2
    %v510 = vadd.f32 %v508, %v509
    %v511 = vrot.slane %v510, 1
    %v512 = vadd.f32 %v510, %v511
    %v513 = vmul.f32 %v503, %v503
    %v514 = vsel %vm112, %v513, 0.0
    %v515 = vrot.slane %v514, 4
    %v516 = vadd.f32 %v514, %v515
    %v517 = vrot.slane %v516, 2
    %v518 = vadd.f32 %v516, %v517
    %v519 = vrot.slane %v518, 1
    %v520 = vadd.f32 %v518, %v519
    %v521 = vmul.f32 %v512, 0.125
    %v522 = vmul.f32 %v520, 0.125
    %v523 = vmul.f32 %v521, %v521
    %v524 = vsub.f32 %v522, %v523
    %v525 = vmax.f32 %v524, 0.0
    %v526 = vsub.f32 %v503, %v521
    %v527 = vadd.f32 %v525, 1e-05
    %v528 = vrsqrt.pop %v527
    %v529 = vmul.f32 %v526, %v528
    %v530 = vmax.f32 %v529, 0.0
    %v531 = vld [vmem:[%s7] sm:$0xff]
    %v532 = vld [vmem:[%s7 + $0x8] sm:$0xff]
    %v533 = vld [vmem:[%s7 + $0x10] sm:$0xff]
    %v534 = vld [vmem:[%s7 + $0x18] sm:$0xff]
    %v535 = vld [vmem:[%s7 + $0x20] sm:$0xff]
    %v536 = vld [vmem:[%s7 + $0x28] sm:$0xff]
    %v537 = vld [vmem:[%s7 + $0x30] sm:$0xff]
    %v538 = vld [vmem:[%s7 + $0x38] sm:$0xff]
    %v539 = vld [vmem:[%s8] sm:$0x1]
    %v541 = vlaneseq
    %v542 = vshrl.u32 %v541, 7
    %v543 = vsub.s32 0, %v542
    %v544 = vrot.slane %v539, %v543
    %v547 = vsel %vm112, %v530, 0
    %549 = vmatprep.subr.mxu0 0.0
    %550 = vmatpush1.msra.mxu0 0.0
    %551 = vmatprep.subr.mxu0 0.0
    %552 = vmatpush1.msra.mxu0 0.0
    %553 = vmatprep.subr.mxu0 0.0
    %554 = vmatpush1.msra.mxu0 0.0
    %555 = vmatprep.subr.mxu0 0.0
    %556 = vmatpush1.msra.mxu0 0.0
    %557 = vmatprep.subr.mxu0 0.0
    %558 = vmatpush1.msra.mxu0 0.0
    %559 = vmatprep.subr.mxu0 0.0
    %560 = vmatpush1.msra.mxu0 0.0
    %561 = vmatprep.subr.mxu0 0.0
    %562 = vmatpush1.msra.mxu0 0.0
    %563 = vmatprep.subr.mxu0 0.0
    %564 = vmatpush1.msra.mxu0 0.0
    %565 = vmatprep.subr.mxu0 0.0
    %566 = vmatpush1.msra.mxu0 %v538
    %567 = vmatprep.subr.mxu0 0.0
    %568 = vmatpush1.msra.mxu0 %v537
    %569 = vmatprep.subr.mxu0 0.0
    %570 = vmatpush1.msra.mxu0 %v536
    %571 = vmatprep.subr.mxu0 0.0
    %572 = vmatpush1.msra.mxu0 %v535
    %573 = vmatprep.subr.mxu0 0.0
    %574 = vmatpush1.msra.mxu0 %v534
    %575 = vmatprep.subr.mxu0 0.0
    %576 = vmatpush1.msra.mxu0 %v533
    %577 = vmatprep.subr.mxu0 0.0
    %578 = vmatpush1.msra.mxu0 %v532
    %579 = vmatprep.subr.mxu0 0.0
    %580 = vmatpush1.msra.mxu0 %v531
    %581 = vmatprep.subr.mxu0 0.0
    %582 = vmatpush2.msra.mxu0 0.0
    %583 = vmatprep.subr.mxu0 0.0
    %584 = vmatpush2.msra.mxu0 0.0
    %585 = vmatprep.subr.mxu0 0.0
    %586 = vmatpush2.msra.mxu0 0.0
    %587 = vmatprep.subr.mxu0 0.0
    %588 = vmatpush2.msra.mxu0 0.0
    %589 = vmatprep.subr.mxu0 0.0
    %590 = vmatpush2.msra.mxu0 0.0
    %591 = vmatprep.subr.mxu0 0.0
    %592 = vmatpush2.msra.mxu0 0.0
    %593 = vmatprep.subr.mxu0 0.0
    %594 = vmatpush2.msra.mxu0 0.0
    %595 = vmatprep.subr.mxu0 0.0
    %596 = vmatpush2.msra.mxu0 0.0
    %597 = vmatprep.subr.mxu0 0.0
    %598 = vmatpush2.msra.mxu0 0.0
    %599 = vmatprep.subr.mxu0 0.0
    %600 = vmatpush2.msra.mxu0 0.0
    %601 = vmatprep.subr.mxu0 0.0
    %602 = vmatpush2.msra.mxu0 0.0
    %603 = vmatprep.subr.mxu0 0.0
    %604 = vmatpush2.msra.mxu0 0.0
    %605 = vmatprep.subr.mxu0 0.0
    %606 = vmatpush2.msra.mxu0 0.0
    %607 = vmatprep.subr.mxu0 0.0
    %608 = vmatpush2.msra.mxu0 0.0
    %609 = vmatprep.subr.mxu0 0.0
    %610 = vmatpush2.msra.mxu0 0.0
    %611 = vmatprep.subr.mxu0 0.0
    %612 = vmatpush2.msra.mxu0 0.0
    %613 = vmatprep.mubr.f32.mxu0 0.0
    %614 = vmatmul.mubr.f32.gmra.mxu0 %v547
    %v615 = vpop.f32.mrf.mxu0
    %v616 = vadd.f32 %v544, %v615
    %v617 = vpop.f32.mrf.mxu0
    %618 = vdwg.mxu0
    %v619 = vtanh.pop %v616
    %620 = vst.msk [vmem:[#allocation2] sm:$0xff] %vm38, %v619
    // Predicated region
    $region38: #{tpu_custom_call.1} parent=1 // pred_check
      _
    $region39: #{tpu_custom_call.1} parent=1 // pred_check_branch
      %622 = sbr.rel (0) target = $region41
    $region40: #{tpu_custom_call.1} parent=1 // pred_region
      %s624 = ssub.s32 128, 128
      %625 = vsyncadd [#allocation3], %s624
      %s627 = sshll.u32 [#allocation2], 4
      %s628 = int_to_ptr.vmem [resolvable:$true] %s627
      %630 = dma.vmem_to_hbm [thread:$0]  %s628, 128, %s9, [#allocation3]
    $region41: #{tpu_custom_call.1} parent=1 // pred_fallthru
      _
    // Predicated region
    $region42: #{tpu_custom_call.1} parent=1 // pred_check
      _
    $region43: #{tpu_custom_call.1} parent=1 // pred_check_branch
      %632 = sbr.rel (0) target = $region45
    $region44: #{tpu_custom_call.1} parent=1 // pred_region
      %633 = dma.done [#allocation3], 128
    $region45: #{tpu_custom_call.1} parent=1 // pred_fallthru
      _
    %634 = vsyncpa [#allocation3], 1

</llo_original>
